<compile_context>
chip_gen: v7x
topology: tpu7x:2x2x1
jax: 0.10.0
libtpu: 0.0.40
codegen_flags: <defaults>
</compile_context>

<pallas_src>
import math

import jax
import jax.numpy as jnp
from jax.experimental import pallas as pl
from jax.experimental.pallas import tpu as pltpu


def _make_eca_kernel(K, pad, C, inv_hw):
    """Build kernel(w_ref, x_ref, o_ref, pbuf) for static K / pad / C / 1/(H*W)."""

    def kernel(w_ref, x_ref, o_ref, pbuf):
        # w_ref: (K,) f32 conv taps in SMEM (scalar prefetch)
        # x_ref: (bt, C, HW) input block, native dtype
        # o_ref: (bt, C, HW) output block, native dtype
        # pbuf : (bt, C + 2*pad) f32 VMEM scratch (zero-halo'd pooled vector)

        # Global average pool; f32 accumulation fused into the reduction
        # (no whole-block astype temp).
        pooled = jnp.sum(x_ref[...], axis=-1, dtype=jnp.float32) * inv_hw   # (bt, C)

        # Zero only the 2*pad halo columns, write the pooled vector in the middle,
        # then the channel conv is K statically-shifted slices of the scratch.
        if pad > 0:
            pbuf[:, 0:pad] = jnp.zeros((pbuf.shape[0], pad), jnp.float32)
            pbuf[:, C + pad:C + 2 * pad] = jnp.zeros((pbuf.shape[0], pad), jnp.float32)
        pbuf[:, pad:pad + C] = pooled

        conv = w_ref[0] * pbuf[:, 0:C]
        for j in range(1, K):
            conv = conv + w_ref[j] * pbuf[:, j:j + C]

        y = jax.nn.sigmoid(conv)                                            # (bt, C) f32

        # Per-channel rescale, broadcast over the spatial (lane) dim.
        # Re-read the block from the (already VMEM-resident) ref instead of keeping a
        # multi-MiB value live across the pool/conv/sigmoid.
        o_ref[...] = x_ref[...] * y.astype(o_ref.dtype)[:, :, None]

    return kernel


def _tpu_vmem_bytes():
    """Per-core VMEM capacity (falls back to the smallest, v7x-sized, value)."""
    try:
        return int(pltpu.get_tpu_info().vmem_capacity_bytes)
    except Exception:
        return 64 * 1024 * 1024


def eca_block_pallas(x_nchw, conv_w, block_budget_bytes=None):
    """x_nchw: (B, C, H, W); conv_w: (1, 1, K) Conv1d weight (no bias), odd K."""
    B, C, H, W = x_nchw.shape
    K = int(conv_w.shape[-1])
    assert K % 2 == 1, "ECA uses an odd Conv1d kernel size ('same' padding semantics)"
    pad = (K - 1) // 2
    w = conv_w.reshape(K).astype(jnp.float32)

    HW = H * W
    # No lane padding: (bt, C, HW) is a legal block because C and HW are the full
    # array extents (exempt from the (8,128) divisibility rule).
    x3 = x_nchw.reshape(B, C, HW)

    itemsize = jnp.dtype(x_nchw.dtype).itemsize
    per_batch_bytes = C * HW * itemsize

    vmem_bytes = _tpu_vmem_bytes()
    # v5e/v6e: 128 MiB VMEM, one TensorCore; v7x: 64 MiB per core, two TensorCores.
    single_tc = vmem_bytes > (96 << 20)

    # Per-step block budget: big enough to amortize the ~0.35 us per-grid-step cost,
    # small enough that double-buffered in+out (4x block) plus slack fits VMEM.
    if block_budget_bytes is None:
        block_budget_bytes = (24 << 20) if single_tc else (12 << 20)
    block_budget_bytes = min(block_budget_bytes,
                             max((vmem_bytes - (8 << 20)) // 4, 1 << 20))

    bt = max(1, min(B, block_budget_bytes // max(per_batch_bytes, 1)))
    if (not single_tc) and B >= 2:
        # v7x only: keep >= 2 grid steps so both TensorCores get work.
        bt = min(bt, pl.cdiv(B, 2))
    # Partial edge block is fine: batch rows are independent, out-of-range rows of the
    # clamped edge block are discarded on write by Pallas.
    grid_b = pl.cdiv(B, bt)
    # TODO(synk): for B == 1 on v7x (single grid step), add a second parallel grid
    # axis over channel groups with a `pad`-wide halo so both TensorCores get work.

    block_bytes = bt * per_batch_bytes
    vmem_limit = int(min(vmem_bytes, max(32 << 20, 4 * block_bytes + (8 << 20))))

    kernel = _make_eca_kernel(K, pad, C, 1.0 / float(HW))

    cost = pl.CostEstimate(
        flops=2 * B * C * HW + 2 * K * B * C,
        transcendentals=B * C,
        bytes_accessed=2 * B * C * HW * itemsize + K * 4,
    )

    out3 = pl.pallas_call(
        kernel,
        out_shape=jax.ShapeDtypeStruct((B, C, HW), x_nchw.dtype),
        grid_spec=pltpu.PrefetchScalarGridSpec(
            num_scalar_prefetch=1,                        # conv taps -> SMEM
            grid=(grid_b,),
            in_specs=[pl.BlockSpec((bt, C, HW), lambda b, w_ref: (b, 0, 0))],
            out_specs=pl.BlockSpec((bt, C, HW), lambda b, w_ref: (b, 0, 0)),
            scratch_shapes=[pltpu.VMEM((bt, C + 2 * pad), jnp.float32)],
        ),
        compiler_params=pltpu.CompilerParams(
            dimension_semantics=("parallel",),
            vmem_limit_bytes=vmem_limit,
        ),
        cost_estimate=cost,
    )(w, x3)

    return out3.reshape(B, C, H, W)


def eca_block_reference(x, conv_w):
    """Pure-JAX reference mirroring the PyTorch forward."""
    B, C, H, W = x.shape
    K = conv_w.shape[-1]
    pad = (K - 1) // 2
    w = conv_w.reshape(K).astype(jnp.float32)
    y = x.astype(jnp.float32).mean(axis=(2, 3))                   # (B, C)
    yp = jnp.pad(y, ((0, 0), (pad, pad)))
    conv = jnp.zeros((B, C), jnp.float32)
    for j in range(K):
        conv = conv + w[j] * yp[:, j:j + C]
    s = jax.nn.sigmoid(conv)
    return (x.astype(jnp.float32) * s[:, :, None, None]).astype(x.dtype)


def _kernel_size(channel, b=1, gamma=2):
    ks = int(abs((math.log(channel, 2) + b) / gamma))
    return ks if ks % 2 else ks + 1


def _run_case(key, B, C, H, W, block_budget_bytes=None):
    ks = _kernel_size(C)
    kx, kw, key = jax.random.split(key, 3)
    x = jax.random.normal(kx, (B, C, H, W), dtype=jnp.float32)
    bound = 1.0 / math.sqrt(ks)                      # PyTorch-like kaiming-uniform bound
    conv_w = jax.random.uniform(kw, (1, 1, ks), minval=-bound, maxval=bound,
                                dtype=jnp.float32)
    out = jax.block_until_ready(
        eca_block_pallas(x, conv_w, block_budget_bytes=block_budget_bytes))
    ref = eca_block_reference(x, conv_w)
    assert out.shape == (B, C, H, W)
    assert jnp.allclose(out, ref, atol=1e-5, rtol=1e-5), \
        f"Pallas mismatch for shape {(B, C, H, W)}"
    return key


if __name__ == "__main__":
    key = jax.random.PRNGKey(0)

    # Case 1: NCHW input consistent with the module (C=8 -> kernel_size=3).
    key = _run_case(key, B=2, C=8, H=16, W=16)

    # Case 2: spatial size not a multiple of 128 lanes (no host padding needed).
    key = _run_case(key, B=3, C=16, H=12, W=12)

    # Case 3: K=5 taps (C=256), odd batch with a forced tiny block budget so the grid
    # has a partial edge block (bt does not divide B).
    key = _run_case(key, B=5, C=256, H=6, W=6, block_budget_bytes=80_000)

    print("KERNEL_OK")
</pallas_src>

<mosaic_0001>
module attributes {stable_mosaic.version = 11 : i64} {
  func.func @kernel(%arg0: i32, %arg1: memref<3xf32, #tpu.memory_space<smem>>, %arg2: memref<1x8x256xf32, #tpu.memory_space<vmem>>, %arg3: memref<1x8x256xf32, #tpu.memory_space<vmem>>, %arg4: memref<1x10xf32, #tpu.memory_space<vmem>>) attributes {dimension_semantics = [#tpu.dimension_semantics<parallel>], iteration_bounds = array<i64: 2>, scalar_prefetch = 1 : i64, scratch_operands = 1 : i64, tpu.core_type = #tpu.core_type<tc>, window_params = [{transform_indices = @transform_0, window_bounds = array<i64: 1, 8, 256>}, {transform_indices = @transform_1, window_bounds = array<i64: 1, 8, 256>}]} {
    %c0 = arith.constant 0 : index
    %c0_0 = arith.constant 0 : index
    %c0_1 = arith.constant 0 : index
    %0 = vector.load %arg2[%c0, %c0_0, %c0_1] : memref<1x8x256xf32, #tpu.memory_space<vmem>>, vector<1x8x256xf32>
    %cst = arith.constant dense<0.000000e+00> : vector<1x8xf32>
    %1 = vector.multi_reduction <add>, %0, %cst [2] : vector<1x8x256xf32> to vector<1x8xf32>
    %cst_2 = arith.constant 3.906250e-03 : f32
    %2 = vector.broadcast %cst_2 : f32 to vector<1x8xf32>
    %3 = arith.mulf %1, %2 : vector<1x8xf32>
    %cst_3 = arith.constant 0.000000e+00 : f32
    %4 = vector.broadcast %cst_3 : f32 to vector<1x1xf32>
    %c0_4 = arith.constant 0 : index
    %c0_5 = arith.constant 0 : index
    %5 = vector.load %arg4[%c0_4, %c0_5] : memref<1x10xf32, #tpu.memory_space<vmem>>, vector<1x1xf32>
    tpu.vector_store %arg4[%c0_4, %c0_5], %4 {strides = array<i32>} : memref<1x10xf32, #tpu.memory_space<vmem>>, vector<1x1xf32>,
    %cst_6 = arith.constant 0.000000e+00 : f32
    %6 = vector.broadcast %cst_6 : f32 to vector<1x1xf32>
    %c0_7 = arith.constant 0 : index
    %c9 = arith.constant 9 : index
    %7 = vector.load %arg4[%c0_7, %c9] : memref<1x10xf32, #tpu.memory_space<vmem>>, vector<1x1xf32>
    tpu.vector_store %arg4[%c0_7, %c9], %6 {strides = array<i32>} : memref<1x10xf32, #tpu.memory_space<vmem>>, vector<1x1xf32>,
    %c0_8 = arith.constant 0 : index
    %c1 = arith.constant 1 : index
    %8 = vector.load %arg4[%c0_8, %c1] : memref<1x10xf32, #tpu.memory_space<vmem>>, vector<1x8xf32>
    tpu.vector_store %arg4[%c0_8, %c1], %3 {strides = array<i32>} : memref<1x10xf32, #tpu.memory_space<vmem>>, vector<1x8xf32>,
    %c0_9 = arith.constant 0 : index
    %9 = memref.load %arg1[%c0_9] : memref<3xf32, #tpu.memory_space<smem>>
    %c0_10 = arith.constant 0 : index
    %c0_11 = arith.constant 0 : index
    %10 = vector.load %arg4[%c0_10, %c0_11] : memref<1x10xf32, #tpu.memory_space<vmem>>, vector<1x8xf32>
    %11 = vector.broadcast %9 : f32 to vector<1x8xf32>
    %12 = arith.mulf %11, %10 : vector<1x8xf32>
    %c1_12 = arith.constant 1 : index
    %13 = memref.load %arg1[%c1_12] : memref<3xf32, #tpu.memory_space<smem>>
    %c0_13 = arith.constant 0 : index
    %c1_14 = arith.constant 1 : index
    %14 = vector.load %arg4[%c0_13, %c1_14] : memref<1x10xf32, #tpu.memory_space<vmem>>, vector<1x8xf32>
    %15 = vector.broadcast %13 : f32 to vector<1x8xf32>
    %16 = arith.mulf %15, %14 : vector<1x8xf32>
    %17 = arith.addf %12, %16 : vector<1x8xf32>
    %c2 = arith.constant 2 : index
    %18 = memref.load %arg1[%c2] : memref<3xf32, #tpu.memory_space<smem>>
    %c0_15 = arith.constant 0 : index
    %c2_16 = arith.constant 2 : index
    %19 = vector.load %arg4[%c0_15, %c2_16] : memref<1x10xf32, #tpu.memory_space<vmem>>, vector<1x8xf32>
    %20 = vector.broadcast %18 : f32 to vector<1x8xf32>
    %21 = arith.mulf %20, %19 : vector<1x8xf32>
    %22 = arith.addf %17, %21 : vector<1x8xf32>
    %23 = arith.negf %22 : vector<1x8xf32>
    %24 = math.exp %23 : vector<1x8xf32>
    %cst_17 = arith.constant 1.000000e+00 : f32
    %25 = vector.broadcast %cst_17 : f32 to vector<1x8xf32>
    %26 = arith.addf %25, %24 : vector<1x8xf32>
    %27 = arith.divf %25, %26 : vector<1x8xf32>
    %c0_18 = arith.constant 0 : index
    %c0_19 = arith.constant 0 : index
    %c0_20 = arith.constant 0 : index
    %28 = vector.load %arg2[%c0_18, %c0_19, %c0_20] : memref<1x8x256xf32, #tpu.memory_space<vmem>>, vector<1x8x256xf32>
    %29 = vector.shape_cast %27 : vector<1x8xf32> to vector<1x8x1xf32>
    %30 = vector.broadcast %29 : vector<1x8x1xf32> to vector<1x8x256xf32>
    %31 = arith.mulf %28, %30 : vector<1x8x256xf32>
    %c0_21 = arith.constant 0 : index
    %c0_22 = arith.constant 0 : index
    %c0_23 = arith.constant 0 : index
    %32 = vector.load %arg3[%c0_21, %c0_22, %c0_23] : memref<1x8x256xf32, #tpu.memory_space<vmem>>, vector<1x8x256xf32>
    tpu.vector_store %arg3[%c0_21, %c0_22, %c0_23], %31 {strides = array<i32>} : memref<1x8x256xf32, #tpu.memory_space<vmem>>, vector<1x8x256xf32>,
    return
  }
  func.func @transform_0(%arg0: i32, %arg1: memref<3xf32, #tpu.memory_space<smem>>) -> (i32, i32, i32) {
    %c0_i32 = arith.constant 0 : i32
    %c0_i32_0 = arith.constant 0 : i32
    %c0_i32_1 = arith.constant 0 : i32
    return %arg0, %c0_i32, %c0_i32_0 : i32, i32, i32
  }
  func.func @transform_1(%arg0: i32, %arg1: memref<3xf32, #tpu.memory_space<smem>>) -> (i32, i32, i32) {
    %c0_i32 = arith.constant 0 : i32
    %c0_i32_0 = arith.constant 0 : i32
    %c0_i32_1 = arith.constant 0 : i32
    return %arg0, %c0_i32, %c0_i32_0 : i32, i32, i32
  }
}

</mosaic_0001>

<llo_original>
// kernel: tpu_custom_call.1
$region0: #{tpu_custom_call.1}
  #allocation0 [shape = 'u32[]', space=smem, size = 0x4, offset = 0x4, fixed_abs, tag = 'smem constant byte address 0x4 - core index']
  #allocation1 [shape = 'u32[144,128]{1,0:T(1,128)}', space=vmem, size = 0x12000, scoped, tag = 'internal scratch']
  #allocation2 [shape = 'f32[1,10]{1,0:T(1,128)}', space=vmem, size = 0x200, scoped, tag = 'scratch operand']
  #allocation3 [shape = 's32[1]{0}', space=sflag, size = 0x4, scoped, tag = 'scoped memory for tpu_custom_call.1']
  #allocation4 [shape = 'u8[512]{0}', space=smem, size = 0x200, scoped, tag = 'prefetched SMEM operand 0']
  %s0 = inlined_call_operand.hbm [shape: f32[3], index: 0, kind: input, shape index: {}]
  %s1 = inlined_call_operand.hbm [shape: f32[2,8,256], index: 1, kind: input, shape index: {}]
  %s2 = inlined_call_operand.hbm [shape: f32[2,8,256], index: 2, kind: output, shape index: {}]
  %s3 = sld [smem:[#allocation0]]
  $region41: #{tpu_custom_call.1} parent=0
    _
  %s5 = ssub.s32 1, %s3
  %s6 = scalar_select 0, %s5, %s3
  %8 = dma.hbm_to_smem %s0, 16, [#allocation4], [#allocation3]
  %9 = dma.done [#allocation3], 16
  %10 = sfence
  $region1: #{tpu_custom_call.1} parent=0
    #allocation5 [shape = 'u8[16384]{0}', space=vmem, size = 0x4000, scoped, tag = 'input window, operand 1']
    #allocation6 [shape = 's32[2]{0}', space=sflag, size = 0x8, scoped, tag = 'scoped memory for tpu_custom_call.1']
    #allocation7 [shape = 's32[2]{0}', space=sflag, size = 0x8, scoped, tag = 'scoped memory for tpu_custom_call.1']
    #allocation8 [shape = 'u8[16384]{0}', space=vmem, size = 0x4000, scoped, tag = 'output window, operand 0']
    %11 = vsyncpa [#allocation6], 0
    %s12 = scalar_lea.sflag [#allocation6], 1
    %13 = vsyncpa %s12, 0
    %14 = vsyncpa [#allocation7], 0
    %s15 = scalar_lea.sflag [#allocation7], 1
    %16 = vsyncpa %s15, 0
    loop: start=0, step=1, limit=4
    $region2: #{tpu_custom_call.1} parent=1 // loop_pre_header
      _
    $region3: #{tpu_custom_call.1} parent=1 // loop_header
      %s18 = sphi 0, %s22
      %p19 = scmp.ge.s32.totalorder %s18, 4
      %s28 = sphi 0, %s30
      %s31 = sphi 0, %s28
      %s32 = sphi 0, %s31
      %s48 = sphi 0, %s32
      %s54 = sphi 0, %s56
      %s57 = sphi 0, %s54
      %s58 = sphi 0, %s57
      %s74 = sphi 0, %s58
    $region4: #{tpu_custom_call.1} parent=1 // loop_header_branch
      %21 = sbr.rel (%p19) target = $region8
    $region5: #{tpu_custom_call.1} parent=1 // loop_body
      %s23 = ssub.s32 %s18, 1
      %s24 = ssub.s32 %s18, 2
      %s25 = sadd.s32 %s18, 1
      %s26 = ssub.s32 %s18, %s25
      %p27 = scmp.eq.s32.totalorder %s26, 0
      %s29 = sadd.s32 %s28, 1
      %s30 = scalar_select %p27, %s28, %s29
      %p33 = pneg %p27
      %p34 = scmp.eq.s32.totalorder %s18, 1
      %p35 = por %p33, %p34
      %p36 = scmp.ne.s32.totalorder %s28, %s31
      %p37 = scmp.eq.s32.totalorder %s18, 0
      %p38 = por %p36, %p37
      %p39 = scmp.ne.s32.totalorder %s28, %s31
      %p40 = scmp.eq.s32.totalorder %s23, 1
      %p41 = por %p39, %p40
      %p42 = scmp.ne.s32.totalorder %s31, %s32
      %p43 = scmp.eq.s32.totalorder %s23, 0
      %p44 = por %p42, %p43
      %p45 = scmp.ne.s32.totalorder %s31, %s32
      %p46 = scmp.eq.s32.totalorder %s24, 1
      %p47 = por %p45, %p46
      %p49 = scmp.ne.s32.totalorder %s32, %s48
      %p50 = scmp.eq.s32.totalorder %s24, 0
      %p51 = por %p49, %p50
      %s52 = ssub.s32 %s18, %s25
      %p53 = scmp.eq.s32.totalorder %s52, 0
      %s55 = sadd.s32 %s54, 1
      %s56 = scalar_select %p53, %s54, %s55
      %p59 = pneg %p53
      %p60 = scmp.eq.s32.totalorder %s18, 1
      %p61 = por %p59, %p60
      %p62 = scmp.ne.s32.totalorder %s54, %s57
      %p63 = scmp.eq.s32.totalorder %s18, 0
      %p64 = por %p62, %p63
      %p65 = scmp.ne.s32.totalorder %s54, %s57
      %p66 = scmp.eq.s32.totalorder %s23, 1
      %p67 = por %p65, %p66
      %p68 = scmp.ne.s32.totalorder %s57, %s58
      %p69 = scmp.eq.s32.totalorder %s23, 0
      %p70 = por %p68, %p69
      %p71 = scmp.ne.s32.totalorder %s57, %s58
      %p72 = scmp.eq.s32.totalorder %s24, 1
      %p73 = por %p71, %p72
      %p75 = scmp.ne.s32.totalorder %s58, %s74
      %p76 = scmp.eq.s32.totalorder %s24, 0
      %p77 = por %p75, %p76
      %p78 = scmp.le.s32.totalorder 1, %s18
      %p79 = scmp.lt.s32.totalorder %s18, 3
      %p80 = pnand %p78, %p79
      %p81 = pneg %p80
      // Predicated region
      $region9: #{tpu_custom_call.1} parent=5 // pred_check
        _
      $region10: #{tpu_custom_call.1} parent=5 // pred_check_branch
        %83 = sbr.rel (%p80) target = $region12
      $region11: #{tpu_custom_call.1} parent=5 // pred_region
        %s84 = ssub.s32 %s18, 1
      $region12: #{tpu_custom_call.1} parent=5 // pred_fallthru
        _
      %p85 = scmp.lt.s32.totalorder %s18, 2
      // Predicated region
      $region13: #{tpu_custom_call.1} parent=5 // pred_check
        %p86 = pneg %p85
      $region14: #{tpu_custom_call.1} parent=5 // pred_check_branch
        %88 = sbr.rel (%p86) target = $region16
      $region15: #{tpu_custom_call.1} parent=5 // pred_region
        // Predicated region
        $region17: #{tpu_custom_call.1} parent=15 // pred_check
          %p89 = pneg %p38
        $region18: #{tpu_custom_call.1} parent=15 // pred_check_branch
          %91 = sbr.rel (%p89) target = $region20
        $region19: #{tpu_custom_call.1} parent=15 // pred_region
          %s92 = sand.u32 %s28, 1
          %s93 = scalar_lea.sflag [#allocation6], %s92
          %s94 = sand.u32 %s28, 1
          %s95 = smul.addr %s94, 16
          %s96 = scalar_lea.vmem [#allocation5], %s95
          %s98 = ssub.s32 256, 256
          %99 = vsyncadd %s93, %s98
          %s100 = smul.addr %s18, 2
          %s101 = smul.addr %s100, 128
          %s102 = scalar_lea.hbm %s1, %s101
          %s104 = sshll.u32 %s96, 4
          %s105 = int_to_ptr.vmem [resolvable:$true] %s104
          %107 = dma.hbm_to_vmem [thread:$0]  %s102, 256, %s105, %s93
        $region20: #{tpu_custom_call.1} parent=15 // pred_fallthru
          _
      $region16: #{tpu_custom_call.1} parent=5 // pred_fallthru
        _
      %p108 = scmp.le.s32.totalorder 1, %s18
      %p109 = scmp.lt.s32.totalorder %s18, 3
      %p110 = pnand %p108, %p109
      %p111 = pneg %p110
      // Predicated region
      $region21: #{tpu_custom_call.1} parent=5 // pred_check
        _
      $region22: #{tpu_custom_call.1} parent=5 // pred_check_branch
        %113 = sbr.rel (%p110) target = $region24
      $region23: #{tpu_custom_call.1} parent=5 // pred_region
        %s114 = ssub.s32 %s18, 1
        %s115 = sand.u32 %s31, 1
        %s116 = scalar_lea.sflag [#allocation6], %s115
        %s117 = sand.u32 %s31, 1
        %s118 = smul.addr %s117, 16
        %s119 = scalar_lea.vmem [#allocation5], %s118
        // Predicated region
        $region25: #{tpu_custom_call.1} parent=23 // pred_check
          %p120 = pneg %p44
        $region26: #{tpu_custom_call.1} parent=23 // pred_check_branch
          %122 = sbr.rel (%p120) target = $region28
        $region27: #{tpu_custom_call.1} parent=23 // pred_region
          %123 = dma.done %s116, 256
        $region28: #{tpu_custom_call.1} parent=23 // pred_fallthru
          _
        %s124 = sand.u32 %s31, 1
        %s125 = scalar_lea.sflag [#allocation6], %s124
        %s126 = sand.u32 %s31, 1
        %s127 = smul.addr %s126, 16
        %s128 = scalar_lea.vmem [#allocation5], %s127
        %p129 = pneg %p44
        %p130 = pneg %p41
        %p131 = pneg %p70
        %p132 = pneg %p67
        %s133 = sand.u32 %s57, 1
        %s134 = scalar_lea.sflag [#allocation7], %s133
        %s135 = sand.u32 %s57, 1
        %s136 = smul.addr %s135, 16
        %s137 = scalar_lea.vmem [#allocation8], %s136
        %v138 = vld [vmem:[%s119] sm:$0xff]
        %v139 = vld [vmem:[%s119 + $0x8] sm:$0xff]
        %v140 = vadd.f32 %v138, %v139
        %141 = vadd.xlane.f32.xlu0 %v140
        %v142 = vpop.xlane.xlu0 %141
        %v143 = vmul.f32 %v142, 0.00390625
        %vm144 = vcmask 0
        %145 = vst.msk [vmem:[#allocation2] sm:$0x1] %vm144, 0.0
        %vm146 = vcmask 73800
        %147 = vst.msk [vmem:[#allocation2] sm:$0x1] %vm146, 0.0
        %v149 = vlaneseq
        %v150 = vand.u32 %v149, 127
        %v151 = vadd.s32 %v150, 4294967295
        %v152 = vlaneseq
        %v153 = vshrl.u32 %v152, 7
        %v154 = vsub.s32 %v151, %v153
        %v155 = vrot.slane %v143, %v154
        %vm157 = vcmask 65544
        %158 = vst.msk [vmem:[#allocation2] sm:$0x1] %vm157, %v155
        %s159 = sld [smem:[#allocation4]]
        %v160 = vld [vmem:[#allocation2] sm:$0x1]
        %v161 = vstv %s159
        %v162 = vmul.f32 %v161, %v160
        %s163 = sld [smem:[#allocation4 + $0x1]]
        %v164 = vstv %s163
        %v165 = vmul.f32 %v164, %v160
        %167 = vrot.lane.b32.xlu0 %v165, 127
        %v168 = vpop.permute.xlu0 %167
        %v170 = vadd.f32 %v162, %v168
        %s171 = sld [smem:[#allocation4 + $0x2]]
        %v172 = vstv %s171
        %v173 = vmul.f32 %v172, %v160
        %175 = vrot.lane.b32.xlu0 %v173, 126
        %v176 = vpop.permute.xlu0 %175
        %v178 = vadd.f32 %v170, %v176
        %v179 = vxor.u32 %v178, 2147483648
        %v180 = vmul.f32 %v179, 1.442695
        %v181 = vpow.pop %v180
        %v182 = vadd.f32 %v181, 1.0
        %v183 = vrcp.pop %v182
        %v184 = vmul.f32 1.0, %v183
        %v185 = vld [vmem:[%s119] sm:$0xff]
        %v186 = vld [vmem:[%s119 + $0x8] sm:$0xff]
        %v187 = vlaneseq
        %v188 = vshrl.u32 %v187, 7
        %v189 = vsub.s32 0, %v188
        %v190 = vrot.slane %v184, %v189
        %192 = vbcast.lane.b32.xlu0 %v190, 256
        %v193 = vpop.permute.xlu0 %192
        %v194 = vmul.f32 %v185, %v193
        %v195 = vmul.f32 %v186, %v193
        %196 = vst [vmem:[%s137] sm:$0xff] %v194
        %197 = vst [vmem:[%s137 + $0x8] sm:$0xff] %v195
        %s198 = sand.u32 %s57, 1
        %s199 = scalar_lea.sflag [#allocation7], %s198
        %s200 = sand.u32 %s57, 1
        %s201 = smul.addr %s200, 16
        %s202 = scalar_lea.vmem [#allocation8], %s201
        // Predicated region
        $region29: #{tpu_custom_call.1} parent=23 // pred_check
          %p203 = pneg %p67
        $region30: #{tpu_custom_call.1} parent=23 // pred_check_branch
          %205 = sbr.rel (%p203) target = $region32
        $region31: #{tpu_custom_call.1} parent=23 // pred_region
          %s207 = ssub.s32 256, 256
          %208 = vsyncadd %s199, %s207
          %s209 = smul.addr %s23, 2
          %s210 = smul.addr %s209, 128
          %s211 = scalar_lea.hbm %s2, %s210
          %s213 = sshll.u32 %s202, 4
          %s214 = int_to_ptr.vmem [resolvable:$true] %s213
          %216 = dma.vmem_to_hbm [thread:$0]  %s214, 256, %s211, %s199
        $region32: #{tpu_custom_call.1} parent=23 // pred_fallthru
          _
      $region24: #{tpu_custom_call.1} parent=5 // pred_fallthru
        _
      %p217 = scmp.le.s32.totalorder 2, %s18
      // Predicated region
      $region33: #{tpu_custom_call.1} parent=5 // pred_check
        %p218 = pneg %p217
      $region34: #{tpu_custom_call.1} parent=5 // pred_check_branch
        %220 = sbr.rel (%p218) target = $region36
      $region35: #{tpu_custom_call.1} parent=5 // pred_region
        %s221 = ssub.s32 %s18, 2
        // Predicated region
        $region37: #{tpu_custom_call.1} parent=35 // pred_check
          %p222 = pneg %p73
        $region38: #{tpu_custom_call.1} parent=35 // pred_check_branch
          %224 = sbr.rel (%p222) target = $region40
        $region39: #{tpu_custom_call.1} parent=35 // pred_region
          %s225 = sand.u32 %s58, 1
          %s226 = scalar_lea.sflag [#allocation7], %s225
          %s227 = sand.u32 %s58, 1
          %s228 = smul.addr %s227, 16
          %s229 = scalar_lea.vmem [#allocation8], %s228
          %230 = dma.done %s226, 256
        $region40: #{tpu_custom_call.1} parent=35 // pred_fallthru
          _
      $region36: #{tpu_custom_call.1} parent=5 // pred_fallthru
        _
    $region6: #{tpu_custom_call.1} parent=1 // loop_footer
      %s22 = sadd.s32 1, %s18
    $region7: #{tpu_custom_call.1} parent=1 // loop_footer_branch
      %17 = sbr.rel target = $region3
    $region8: #{tpu_custom_call.1} parent=1 // loop_exit
      _
    %231 = vsyncpa [#allocation6], 1
    %s232 = scalar_lea.sflag [#allocation6], 1
    %233 = vsyncpa %s232, 1
    %234 = vsyncpa [#allocation7], 1
    %s235 = scalar_lea.sflag [#allocation7], 1
    %236 = vsyncpa %s235, 1

</llo_original>
